<compile_context>
chip_gen: v7x
topology: tpu7x:2x2x1
jax: 0.10.0
libtpu: 0.0.40
codegen_flags: <defaults>
</compile_context>

<pallas_src>
import functools

import jax
import jax.numpy as jnp
import numpy as np
from jax import lax
from jax.experimental import pallas as pl
from jax.experimental.pallas import tpu as pltpu

HW = 36          # conv1 expects 36 input channels => h = w = 6
TAU = 0.025
BN_EPS = 1e-5
NORM_EPS = 1e-12


def _l2n(x):
    """L2-normalize along the last (channel) axis, matching F.normalize eps.

    rsqrt(max(ss, eps^2)) == 1/max(sqrt(ss), eps): one EUP rsqrt + VPU mul.
    """
    ss = jnp.sum(x * x, axis=-1, keepdims=True)
    return x * lax.rsqrt(jnp.maximum(ss, NORM_EPS * NORM_EPS))


# ---------------------------------------------------------------------------
# Kernel 1 (grid=(B,)): row / column means of the pairwise cosine-similarity
# tensor, WITHOUT materializing it:
#   m1[i, (j,q)] = mean_p a1[i,j,p,q] = <mean_p f1n[i,p,:], f2n[j,q,:]>
#   m2[j, (i,p)] = mean_q a1[i,j,p,q] = <mean_q f2n[j,q,:], f1n[i,p,:]>
# f1bar/f2bar (per-image means of the normalized features) are computed
# wrapper-side; the kernel does the two big 2D matmuls per batch element.
# ---------------------------------------------------------------------------
def _means_kernel(f1bar_ref, f2bar_ref, f1n_ref, f2n_ref, m1_ref, m2_ref):
    m1_ref[...] = lax.dot_general(f1bar_ref[...], f2n_ref[...],
                                  (((1,), (1,)), ((), ())),
                                  preferred_element_type=jnp.float32)   # (N1, N2*HW)
    m2_ref[...] = lax.dot_general(f2bar_ref[...], f1n_ref[...],
                                  (((1,), (1,)), ((), ())),
                                  preferred_element_type=jnp.float32)   # (N2, N1*HW)


def _pair_means(f1bar, f2bar, f1n_flat, f2n_flat):
    B, N1, C = f1bar.shape
    N2 = f2bar.shape[1]
    R1 = f1n_flat.shape[1]
    R2 = f2n_flat.shape[1]
    out_shape = (jax.ShapeDtypeStruct((B, N1, R2), jnp.float32),
                 jax.ShapeDtypeStruct((B, N2, R1), jnp.float32))
    return pl.pallas_call(
        _means_kernel,
        out_shape=out_shape,
        grid=(B,),
        in_specs=[
            pl.BlockSpec((None, N1, C), lambda b: (b, 0, 0)),
            pl.BlockSpec((None, N2, C), lambda b: (b, 0, 0)),
            pl.BlockSpec((None, R1, C), lambda b: (b, 0, 0)),
            pl.BlockSpec((None, R2, C), lambda b: (b, 0, 0)),
        ],
        out_specs=(
            pl.BlockSpec((None, N1, R2), lambda b: (b, 0, 0)),
            pl.BlockSpec((None, N2, R1), lambda b: (b, 0, 0)),
        ),
        compiler_params=pltpu.CompilerParams(dimension_semantics=("parallel",)),
    )(f1bar, f2bar, f1n_flat, f2n_flat)


# ---------------------------------------------------------------------------
# Kernel 2 (grid=(2,)): ConvBlock(36->6, 1x1) [conv + training-mode BatchNorm]
# + ReLU + Conv2d(6->36, 1x1) for BOTH attention paths in one pallas_call.
# Transposed orientation: the big M = B*N1*N2 axis sits on LANES, the small
# 36/6 channel axes sit on sublanes -> dense stores, full MXU N dimension,
# BN mean/var become lane reductions.  One grid step per path so BatchNorm
# batch statistics stay per-path, matching PyTorch training-mode forward.
# ---------------------------------------------------------------------------
def _mlp_kernel(m_ref, w1_ref, b1_ref, gamma_ref, beta_ref, w2_ref, b2_ref, y_ref):
    m = m_ref[...]                                                           # (36, M)
    z = jnp.dot(w1_ref[...], m, preferred_element_type=jnp.float32) + b1_ref[...]   # (6, M)
    mu = jnp.mean(z, axis=1, keepdims=True)
    var = jnp.mean(jnp.square(z - mu), axis=1, keepdims=True)                # biased, training mode
    zn = (z - mu) * lax.rsqrt(var + BN_EPS) * gamma_ref[...] + beta_ref[...]
    h = jnp.maximum(zn, 0.0)
    y_ref[...] = jnp.dot(w2_ref[...], h, preferred_element_type=jnp.float32) + b2_ref[...]  # (36, M)


def _attention_mlp(m_stacked, params):
    S, hw, M = m_stacked.shape
    full = lambda a: pl.BlockSpec(a.shape, lambda s: (0,) * a.ndim)
    return pl.pallas_call(
        _mlp_kernel,
        out_shape=jax.ShapeDtypeStruct((S, hw, M), jnp.float32),
        grid=(S,),
        in_specs=[pl.BlockSpec((None, hw, M), lambda s: (s, 0, 0)),
                  full(params["w1"]), full(params["b1"]),
                  full(params["gamma"]), full(params["beta"]),
                  full(params["w2"]), full(params["b2"])],
        out_specs=pl.BlockSpec((None, hw, M), lambda s: (s, 0, 0)),
        compiler_params=pltpu.CompilerParams(dimension_semantics=("parallel",)),
    )(m_stacked, params["w1"], params["b1"], params["gamma"], params["beta"],
      params["w2"], params["b2"])


# ---------------------------------------------------------------------------
# Kernel 3 (grid=(B, N1)): per (b, i) recompute what is needed of the
# similarity (never the full 36x36xN2 tensor), apply the MLP outputs,
# softmax(x/0.025)+1 and scale the raw features.  f2/f2n block indices depend
# only on b, so they stay resident across the inner N1 axis (which is marked
# "arbitrary" so v7x megacore splits on b and keeps that residency per core).
# Outputs are (HW, C)-major => lane-dense stores when C is a multiple of 128.
# ---------------------------------------------------------------------------
def _softmax_plus_one(x, axis):
    z = x * (1.0 / TAU)
    z = z - jnp.max(z, axis=axis, keepdims=True)
    e = jnp.exp(z)
    # approx reciprocal (EUP): ~2^-12 relative error on the softmax denominator,
    # a small documented deviation from exact softmax.
    return e * pl.reciprocal(jnp.sum(e, axis=axis, keepdims=True), approx=True) + 1.0


def _attend_kernel(f1_ref, f1n_ref, f2_ref, f2n_ref, y1_ref, y2_ref,
                   *out_refs, emit_att):
    o1_ref, o2_ref = out_refs[0], out_refs[1]

    F1 = f1_ref[...]                               # (HW, C)     raw f1[b, i]
    F1n = f1n_ref[...]                             # (HW, C)     normalized
    F2 = f2_ref[...]                               # (N2, HW, C) raw f2[b]
    F2n = f2n_ref[...]                             # (N2, HW, C) normalized
    y1 = y1_ref[...]                               # (N2, HW)    y1[b,i,j,q]
    y2 = y2_ref[...]                               # (N2, HW)    y2[b,i,j,p]
    inv_hw = 1.0 / F1.shape[0]

    # --- attention over f1's positions p ---------------------------------
    # g1[j, c] = sum_q y1[j, q] * f2n[j, q, c]   (j-batched: VPU mul + sublane reduce)
    g1 = jnp.sum(y1[:, :, None] * F2n, axis=1)                              # (N2, C)
    # w1[j, p] = (1/HW) * <g1[j], f1n[p]>        (single 2D MXU matmul)
    w1 = lax.dot_general(g1, F1n, (((1,), (1,)), ((), ())),
                         preferred_element_type=jnp.float32) * inv_hw       # (N2, HW)
    att1 = _softmax_plus_one(w1, axis=1)                                    # softmax over p

    # --- attention over f2's positions q ---------------------------------
    # h2[j, c] = sum_p y2[j, p] * f1n[p, c]      (single 2D MXU matmul)
    h2 = jnp.dot(y2, F1n, preferred_element_type=jnp.float32)               # (N2, C)
    # w2[j, q] = (1/HW) * <f2n[j,q], h2[j]>      (j-batched: VPU mul + lane reduce)
    w2 = jnp.sum(F2n * h2[:, None, :], axis=2) * inv_hw                     # (N2, HW)
    att2 = _softmax_plus_one(w2, axis=1)                                    # softmax over q

    o1_ref[...] = F1[None, :, :] * att1[:, :, None]                         # (N2, HW, C)
    o2_ref[...] = F2 * att2[:, :, None]                                     # (N2, HW, C)
    if emit_att:
        out_refs[2][...] = att1
        out_refs[3][...] = att2


def _attend(f1p, f1n, f2p, f2n, y1, y2, *, emit_att):
    B, N1, hw, C = f1p.shape
    N2 = f2p.shape[1]
    out_shape = [jax.ShapeDtypeStruct((B, N1, N2, hw, C), jnp.float32),
                 jax.ShapeDtypeStruct((B, N1, N2, hw, C), jnp.float32)]
    out_specs = [pl.BlockSpec((None, None, N2, hw, C), lambda b, i: (b, i, 0, 0, 0)),
                 pl.BlockSpec((None, None, N2, hw, C), lambda b, i: (b, i, 0, 0, 0))]
    if emit_att:
        out_shape += [jax.ShapeDtypeStruct((B, N1, N2, hw), jnp.float32),
                      jax.ShapeDtypeStruct((B, N1, N2, hw), jnp.float32)]
        out_specs += [pl.BlockSpec((None, None, N2, hw), lambda b, i: (b, i, 0, 0)),
                      pl.BlockSpec((None, None, N2, hw), lambda b, i: (b, i, 0, 0))]
    return pl.pallas_call(
        functools.partial(_attend_kernel, emit_att=emit_att),
        out_shape=tuple(out_shape),
        grid=(B, N1),
        in_specs=[
            pl.BlockSpec((None, None, hw, C), lambda b, i: (b, i, 0, 0)),   # f1 raw
            pl.BlockSpec((None, None, hw, C), lambda b, i: (b, i, 0, 0)),   # f1 normalized
            pl.BlockSpec((None, N2, hw, C), lambda b, i: (b, 0, 0, 0)),     # f2 raw (resident / i)
            pl.BlockSpec((None, N2, hw, C), lambda b, i: (b, 0, 0, 0)),     # f2 normalized (resident / i)
            pl.BlockSpec((None, None, N2, hw), lambda b, i: (b, i, 0, 0)),  # y1
            pl.BlockSpec((None, None, N2, hw), lambda b, i: (b, i, 0, 0)),  # y2
        ],
        out_specs=tuple(out_specs),
        compiler_params=pltpu.CompilerParams(
            dimension_semantics=("parallel", "arbitrary")),
    )(f1p, f1n, f2p, f2n, y1, y2)


# ---------------------------------------------------------------------------
# CAM forward (glue in plain JAX: layout plumbing + cheap elementwise only)
# ---------------------------------------------------------------------------
def cam_forward(f1, f2, params, test=False):
    B, N1, C, H, W = f1.shape
    N2 = f2.shape[1]
    hw = H * W
    assert hw == HW, "CAM's 1x1 convs require h*w == 36"
    f32 = jnp.float32

    # position-major (lane-dense) feature layouts: (..., HW, C)
    f1p = jnp.transpose(f1.reshape(B, N1, C, hw), (0, 1, 3, 2)).astype(f32)  # (B,N1,HW,C)
    f2p = jnp.transpose(f2.reshape(B, N2, C, hw), (0, 1, 3, 2)).astype(f32)  # (B,N2,HW,C)

    # normalize ONCE (wrapper-side XLA elementwise) and reuse in both kernels
    f1n = _l2n(f1p)                                                          # (B,N1,HW,C)
    f2n = _l2n(f2p)                                                          # (B,N2,HW,C)
    f1bar = jnp.mean(f1n, axis=2)                                            # (B,N1,C)
    f2bar = jnp.mean(f2n, axis=2)                                            # (B,N2,C)

    m1, m2 = _pair_means(f1bar, f2bar,
                         f1n.reshape(B, N1 * hw, C),
                         f2n.reshape(B, N2 * hw, C))    # (B,N1,N2*HW), (B,N2,N1*HW)

    # MLP in transposed (hw, M) orientation: M = B*N1*N2 on the lane axis.
    M = B * N1 * N2
    m1t = jnp.transpose(m1.reshape(B, N1, N2, hw), (3, 0, 1, 2)).reshape(hw, M)
    m2t = jnp.transpose(m2.reshape(B, N2, N1, hw), (3, 0, 2, 1)).reshape(hw, M)
    m_stacked = jnp.stack([m1t, m2t], axis=0)                               # (2, HW, M)
    y = _attention_mlp(m_stacked, params).reshape(2, hw, B, N1, N2)
    y1 = jnp.transpose(y[0], (1, 2, 3, 0))                                  # (B,N1,N2,HW) [b,i,j,q]
    y2 = jnp.transpose(y[1], (1, 2, 3, 0))                                  # (B,N1,N2,HW) [b,i,j,p]

    res = _attend(f1p, f1n, f2p, f2n, y1, y2, emit_att=test)
    o1, o2 = res[0], res[1]                                                 # (B,N1,N2,HW,C)
    out1 = jnp.transpose(o1, (0, 2, 1, 4, 3)).reshape(B, N2, N1, C, H, W)
    out2 = jnp.transpose(o2, (0, 2, 1, 4, 3)).reshape(B, N2, N1, C, H, W)
    if test:
        return (out1, out2,
                res[2].reshape(B, N1, N2, H, W), res[3].reshape(B, N1, N2, H, W))
    return out1, out2


# ---------------------------------------------------------------------------
# Deterministic parameter init (matches shapes/init scheme in CAM.__init__)
# ---------------------------------------------------------------------------
def init_params(key):
    k1, k2, k3, k4 = jax.random.split(key, 4)
    # conv1: Conv2d(36, 6, 1)   weight ~ N(0, sqrt(2 / (1*1*6)))
    w1 = jax.random.normal(k1, (6, HW), jnp.float32) * np.sqrt(2.0 / 6.0)
    # conv2: Conv2d(6, 36, 1)   weight ~ N(0, sqrt(2 / (1*1*36)))
    w2 = jax.random.normal(k2, (HW, 6), jnp.float32) * np.sqrt(2.0 / 36.0)
    # conv biases (PyTorch default uniform(-1/sqrt(fan_in), 1/sqrt(fan_in)))
    b1 = jax.random.uniform(k3, (6, 1), jnp.float32,
                            -1.0 / np.sqrt(HW), 1.0 / np.sqrt(HW))
    b2 = jax.random.uniform(k4, (HW, 1), jnp.float32,
                            -1.0 / np.sqrt(6.0), 1.0 / np.sqrt(6.0))
    # BatchNorm2d(6): weight=1, bias=0
    gamma = jnp.ones((6, 1), jnp.float32)
    beta = jnp.zeros((6, 1), jnp.float32)
    # TODO(synk): BatchNorm running_mean/var buffer updates (a training-time side
    # effect, not part of the forward's return values) are not modeled.
    return dict(w1=w1, b1=b1, gamma=gamma, beta=beta, w2=w2, b2=b2)


# ---------------------------------------------------------------------------
# Pure-JAX reference (for verification)
# ---------------------------------------------------------------------------
def cam_reference(f1, f2, params):
    hi = jax.lax.Precision.HIGHEST
    B, N1, C, H, W = f1.shape
    N2 = f2.shape[1]
    hw = H * W
    f1v = f1.reshape(B, N1, C, hw).astype(jnp.float32)
    f2v = f2.reshape(B, N2, C, hw).astype(jnp.float32)

    def l2c(x):
        n = jnp.sqrt(jnp.sum(x * x, axis=2, keepdims=True))
        return x / jnp.maximum(n, NORM_EPS)

    f1n, f2n = l2c(f1v), l2c(f2v)
    a1 = jnp.einsum('bicp,bjcq->bijpq', f1n, f2n, precision=hi)

    def get_attention(a):
        input_a = a
        m = jnp.mean(a, axis=3)                                             # (B,N1,N2,Q)
        z = jnp.einsum('bijq,oq->bijo', m, params["w1"], precision=hi) + params["b1"][:, 0]
        mu = jnp.mean(z, axis=(0, 1, 2), keepdims=True)
        var = jnp.mean((z - mu) ** 2, axis=(0, 1, 2), keepdims=True)
        zn = (z - mu) / jnp.sqrt(var + BN_EPS) * params["gamma"][:, 0] + params["beta"][:, 0]
        h = jnp.maximum(zn, 0.0)
        y = jnp.einsum('bijo,qo->bijq', h, params["w2"], precision=hi) + params["b2"][:, 0]
        wgt = jnp.mean(input_a * y[:, :, :, None, :], axis=-1)              # (B,N1,N2,P)
        return jax.nn.softmax(wgt / TAU, axis=-1) + 1.0

    att1 = get_attention(a1)
    att2 = get_attention(jnp.swapaxes(a1, 3, 4))
    o1 = f1v[:, :, None, :, :] * att1[:, :, :, None, :]
    o2 = f2v[:, None, :, :, :] * att2[:, :, :, None, :]
    o1 = o1.reshape(B, N1, N2, C, H, W).transpose(0, 2, 1, 3, 4, 5)
    o2 = o2.reshape(B, N1, N2, C, H, W).transpose(0, 2, 1, 3, 4, 5)
    return o1, o2


if __name__ == "__main__":
    key = jax.random.PRNGKey(0)
    kp, kf1, kf2 = jax.random.split(key, 3)
    params = init_params(kp)

    # h*w must be 36; C=128 keeps the dominant o1/o2 stores lane-dense.
    B, N1, N2, C, H, W = 2, 3, 4, 128, 6, 6
    f1 = jax.random.normal(kf1, (B, N1, C, H, W), jnp.float32)
    f2 = jax.random.normal(kf2, (B, N2, C, H, W), jnp.float32)

    out1, out2 = cam_forward(f1, f2, params)
    jax.block_until_ready((out1, out2))

    # test-mode path (also returns the attention maps, without the width-1 dim)
    t1, t2, a1, a2 = cam_forward(f1, f2, params, test=True)
    jax.block_until_ready((t1, t2, a1, a2))
    assert a1.shape == (B, N1, N2, H, W) and a2.shape == (B, N1, N2, H, W)

    ref1, ref2 = cam_reference(f1, f2, params)
    np.testing.assert_allclose(np.asarray(out1), np.asarray(ref1), rtol=5e-3, atol=5e-3)
    np.testing.assert_allclose(np.asarray(out2), np.asarray(ref2), rtol=5e-3, atol=5e-3)
    assert out1.shape == (B, N2, N1, C, H, W) and out2.shape == (B, N2, N1, C, H, W)

    print("KERNEL_OK")
</pallas_src>

<mosaic_0001>
module attributes {stable_mosaic.version = 11 : i64} {
  func.func @_means_kernel(%arg0: i32, %arg1: memref<1x3x128xf32, #tpu.memory_space<vmem>>, %arg2: memref<1x4x128xf32, #tpu.memory_space<vmem>>, %arg3: memref<1x108x128xf32, #tpu.memory_space<vmem>>, %arg4: memref<1x144x128xf32, #tpu.memory_space<vmem>>, %arg5: memref<1x3x144xf32, #tpu.memory_space<vmem>>, %arg6: memref<1x4x108xf32, #tpu.memory_space<vmem>>) attributes {dimension_semantics = [#tpu.dimension_semantics<parallel>], iteration_bounds = array<i64: 2>, scalar_prefetch = 0 : i64, scratch_operands = 0 : i64, tpu.core_type = #tpu.core_type<tc>, window_params = [{transform_indices = @transform_0, window_bounds = array<i64: 1, 3, 128>}, {transform_indices = @transform_1, window_bounds = array<i64: 1, 4, 128>}, {transform_indices = @transform_2, window_bounds = array<i64: 1, 108, 128>}, {transform_indices = @transform_3, window_bounds = array<i64: 1, 144, 128>}, {transform_indices = @transform_4, window_bounds = array<i64: 1, 3, 144>}, {transform_indices = @transform_5, window_bounds = array<i64: 1, 4, 108>}]} {
    %c0 = arith.constant 0 : index
    %c0_0 = arith.constant 0 : index
    %c0_1 = arith.constant 0 : index
    %0 = vector.load %arg1[%c0, %c0_0, %c0_1] : memref<1x3x128xf32, #tpu.memory_space<vmem>>, vector<1x3x128xf32>
    %1 = vector.shape_cast %0 : vector<1x3x128xf32> to vector<3x128xf32>
    %c0_2 = arith.constant 0 : index
    %c0_3 = arith.constant 0 : index
    %c0_4 = arith.constant 0 : index
    %2 = vector.load %arg4[%c0_2, %c0_3, %c0_4] : memref<1x144x128xf32, #tpu.memory_space<vmem>>, vector<1x144x128xf32>
    %3 = vector.shape_cast %2 : vector<1x144x128xf32> to vector<144x128xf32>
    %cst = arith.constant dense<0.000000e+00> : vector<3x144xf32>
    %4 = tpu.matmul %1, %3, %cst {dimension_numbers = #tpu.dot_dimension_numbers<[1], [1], [0], [0], [0, 0, 1, 0], [], []>} : vector<3x128xf32>, vector<144x128xf32>, vector<3x144xf32> -> vector<3x144xf32>
    %c0_5 = arith.constant 0 : index
    %c0_6 = arith.constant 0 : index
    %c0_7 = arith.constant 0 : index
    %5 = vector.load %arg5[%c0_5, %c0_6, %c0_7] : memref<1x3x144xf32, #tpu.memory_space<vmem>>, vector<1x3x144xf32>
    %6 = vector.shape_cast %5 : vector<1x3x144xf32> to vector<3x144xf32>
    %7 = vector.shape_cast %4 : vector<3x144xf32> to vector<1x3x144xf32>
    tpu.vector_store %arg5[%c0_5, %c0_6, %c0_7], %7 {strides = array<i32>} : memref<1x3x144xf32, #tpu.memory_space<vmem>>, vector<1x3x144xf32>,
    %c0_8 = arith.constant 0 : index
    %c0_9 = arith.constant 0 : index
    %c0_10 = arith.constant 0 : index
    %8 = vector.load %arg2[%c0_8, %c0_9, %c0_10] : memref<1x4x128xf32, #tpu.memory_space<vmem>>, vector<1x4x128xf32>
    %9 = vector.shape_cast %8 : vector<1x4x128xf32> to vector<4x128xf32>
    %c0_11 = arith.constant 0 : index
    %c0_12 = arith.constant 0 : index
    %c0_13 = arith.constant 0 : index
    %10 = vector.load %arg3[%c0_11, %c0_12, %c0_13] : memref<1x108x128xf32, #tpu.memory_space<vmem>>, vector<1x108x128xf32>
    %11 = vector.shape_cast %10 : vector<1x108x128xf32> to vector<108x128xf32>
    %cst_14 = arith.constant dense<0.000000e+00> : vector<4x108xf32>
    %12 = tpu.matmul %9, %11, %cst_14 {dimension_numbers = #tpu.dot_dimension_numbers<[1], [1], [0], [0], [0, 0, 1, 0], [], []>} : vector<4x128xf32>, vector<108x128xf32>, vector<4x108xf32> -> vector<4x108xf32>
    %c0_15 = arith.constant 0 : index
    %c0_16 = arith.constant 0 : index
    %c0_17 = arith.constant 0 : index
    %13 = vector.load %arg6[%c0_15, %c0_16, %c0_17] : memref<1x4x108xf32, #tpu.memory_space<vmem>>, vector<1x4x108xf32>
    %14 = vector.shape_cast %13 : vector<1x4x108xf32> to vector<4x108xf32>
    %15 = vector.shape_cast %12 : vector<4x108xf32> to vector<1x4x108xf32>
    tpu.vector_store %arg6[%c0_15, %c0_16, %c0_17], %15 {strides = array<i32>} : memref<1x4x108xf32, #tpu.memory_space<vmem>>, vector<1x4x108xf32>,
    return
  }
  func.func @transform_0(%arg0: i32) -> (i32, i32, i32) {
    %c0_i32 = arith.constant 0 : i32
    %c0_i32_0 = arith.constant 0 : i32
    %c0_i32_1 = arith.constant 0 : i32
    return %arg0, %c0_i32, %c0_i32_0 : i32, i32, i32
  }
  func.func @transform_1(%arg0: i32) -> (i32, i32, i32) {
    %c0_i32 = arith.constant 0 : i32
    %c0_i32_0 = arith.constant 0 : i32
    %c0_i32_1 = arith.constant 0 : i32
    return %arg0, %c0_i32, %c0_i32_0 : i32, i32, i32
  }
  func.func @transform_2(%arg0: i32) -> (i32, i32, i32) {
    %c0_i32 = arith.constant 0 : i32
    %c0_i32_0 = arith.constant 0 : i32
    %c0_i32_1 = arith.constant 0 : i32
    return %arg0, %c0_i32, %c0_i32_0 : i32, i32, i32
  }
  func.func @transform_3(%arg0: i32) -> (i32, i32, i32) {
    %c0_i32 = arith.constant 0 : i32
    %c0_i32_0 = arith.constant 0 : i32
    %c0_i32_1 = arith.constant 0 : i32
    return %arg0, %c0_i32, %c0_i32_0 : i32, i32, i32
  }
  func.func @transform_4(%arg0: i32) -> (i32, i32, i32) {
    %c0_i32 = arith.constant 0 : i32
    %c0_i32_0 = arith.constant 0 : i32
    %c0_i32_1 = arith.constant 0 : i32
    return %arg0, %c0_i32, %c0_i32_0 : i32, i32, i32
  }
  func.func @transform_5(%arg0: i32) -> (i32, i32, i32) {
    %c0_i32 = arith.constant 0 : i32
    %c0_i32_0 = arith.constant 0 : i32
    %c0_i32_1 = arith.constant 0 : i32
    return %arg0, %c0_i32, %c0_i32_0 : i32, i32, i32
  }
}

</mosaic_0001>

<llo_original>
// kernel: tpu_custom_call.1
$region0: #{tpu_custom_call.1}
  #allocation0 [shape = 'u32[]', space=smem, size = 0x4, offset = 0x4, fixed_abs, tag = 'smem constant byte address 0x4 - core index']
  #allocation1 [shape = 'u32[144,128]{1,0:T(1,128)}', space=vmem, size = 0x12000, scoped, tag = 'internal scratch']
  %s0 = inlined_call_operand.vmem [shape: f32[2,3,128], index: 0, kind: input, shape index: {}]
  %s1 = inlined_call_operand.vmem [shape: f32[2,4,128], index: 1, kind: input, shape index: {}]
  %s2 = inlined_call_operand.vmem [shape: f32[2,108,128], index: 2, kind: input, shape index: {}]
  %s3 = inlined_call_operand.vmem [shape: f32[2,144,128], index: 3, kind: input, shape index: {}]
  %s4 = inlined_call_operand.vmem [shape: f32[2,3,144], index: 4, kind: output, shape index: {0}]
  %s5 = inlined_call_operand.hbm [shape: f32[2,4,108], index: 5, kind: output, shape index: {1}]
  %6 = xla_tuple %s4, %s5
  %s7 = sld [smem:[#allocation0]]
  $region57: #{tpu_custom_call.1} parent=0
    _
  %s9 = ssub.s32 1, %s7
  %s10 = scalar_select 0, %s9, %s7
  $region1: #{tpu_custom_call.1} parent=0
    #allocation2 [shape = 'u8[4096]{0}', space=vmem, size = 0x1000, scoped, tag = 'output window, operand 1']
    #allocation3 [shape = 's32[2]{0}', space=sflag, size = 0x8, scoped, tag = 'scoped memory for tpu_custom_call.1']
    %11 = vsyncpa [#allocation3], 0
    %s12 = scalar_lea.sflag [#allocation3], 1
    %13 = vsyncpa %s12, 0
    loop: start=0, step=1, limit=4
    $region2: #{tpu_custom_call.1} parent=1 // loop_pre_header
      _
    $region3: #{tpu_custom_call.1} parent=1 // loop_header
      %s15 = sphi 0, %s19
      %p16 = scmp.ge.s32.totalorder %s15, 4
      %s25 = sphi 0, %s27
      %s28 = sphi 0, %s25
      %s29 = sphi 0, %s28
      %s45 = sphi 0, %s29
      %s51 = sphi 0, %s53
      %s54 = sphi 0, %s51
      %s55 = sphi 0, %s54
      %s71 = sphi 0, %s55
      %s77 = sphi 0, %s79
      %s80 = sphi 0, %s77
      %s81 = sphi 0, %s80
      %s97 = sphi 0, %s81
      %s103 = sphi 0, %s105
      %s106 = sphi 0, %s103
      %s107 = sphi 0, %s106
      %s123 = sphi 0, %s107
      %s129 = sphi 0, %s131
      %s132 = sphi 0, %s129
      %s133 = sphi 0, %s132
      %s149 = sphi 0, %s133
      %s155 = sphi 0, %s157
      %s158 = sphi 0, %s155
      %s159 = sphi 0, %s158
      %s175 = sphi 0, %s159
    $region4: #{tpu_custom_call.1} parent=1 // loop_header_branch
      %18 = sbr.rel (%p16) target = $region8
    $region5: #{tpu_custom_call.1} parent=1 // loop_body
      %s20 = ssub.s32 %s15, 1
      %s21 = ssub.s32 %s15, 2
      %s22 = sadd.s32 %s15, 1
      %s23 = ssub.s32 %s15, %s22
      %p24 = scmp.eq.s32.totalorder %s23, 0
      %s26 = sadd.s32 %s25, 1
      %s27 = scalar_select %p24, %s25, %s26
      %p30 = pneg %p24
      %p31 = scmp.eq.s32.totalorder %s15, 1
      %p32 = por %p30, %p31
      %p33 = scmp.ne.s32.totalorder %s25, %s28
      %p34 = scmp.eq.s32.totalorder %s15, 0
      %p35 = por %p33, %p34
      %p36 = scmp.ne.s32.totalorder %s25, %s28
      %p37 = scmp.eq.s32.totalorder %s20, 1
      %p38 = por %p36, %p37
      %p39 = scmp.ne.s32.totalorder %s28, %s29
      %p40 = scmp.eq.s32.totalorder %s20, 0
      %p41 = por %p39, %p40
      %p42 = scmp.ne.s32.totalorder %s28, %s29
      %p43 = scmp.eq.s32.totalorder %s21, 1
      %p44 = por %p42, %p43
      %p46 = scmp.ne.s32.totalorder %s29, %s45
      %p47 = scmp.eq.s32.totalorder %s21, 0
      %p48 = por %p46, %p47
      %s49 = ssub.s32 %s15, %s22
      %p50 = scmp.eq.s32.totalorder %s49, 0
      %s52 = sadd.s32 %s51, 1
      %s53 = scalar_select %p50, %s51, %s52
      %p56 = pneg %p50
      %p57 = scmp.eq.s32.totalorder %s15, 1
      %p58 = por %p56, %p57
      %p59 = scmp.ne.s32.totalorder %s51, %s54
      %p60 = scmp.eq.s32.totalorder %s15, 0
      %p61 = por %p59, %p60
      %p62 = scmp.ne.s32.totalorder %s51, %s54
      %p63 = scmp.eq.s32.totalorder %s20, 1
      %p64 = por %p62, %p63
      %p65 = scmp.ne.s32.totalorder %s54, %s55
      %p66 = scmp.eq.s32.totalorder %s20, 0
      %p67 = por %p65, %p66
      %p68 = scmp.ne.s32.totalorder %s54, %s55
      %p69 = scmp.eq.s32.totalorder %s21, 1
      %p70 = por %p68, %p69
      %p72 = scmp.ne.s32.totalorder %s55, %s71
      %p73 = scmp.eq.s32.totalorder %s21, 0
      %p74 = por %p72, %p73
      %s75 = ssub.s32 %s15, %s22
      %p76 = scmp.eq.s32.totalorder %s75, 0
      %s78 = sadd.s32 %s77, 1
      %s79 = scalar_select %p76, %s77, %s78
      %p82 = pneg %p76
      %p83 = scmp.eq.s32.totalorder %s15, 1
      %p84 = por %p82, %p83
      %p85 = scmp.ne.s32.totalorder %s77, %s80
      %p86 = scmp.eq.s32.totalorder %s15, 0
      %p87 = por %p85, %p86
      %p88 = scmp.ne.s32.totalorder %s77, %s80
      %p89 = scmp.eq.s32.totalorder %s20, 1
      %p90 = por %p88, %p89
      %p91 = scmp.ne.s32.totalorder %s80, %s81
      %p92 = scmp.eq.s32.totalorder %s20, 0
      %p93 = por %p91, %p92
      %p94 = scmp.ne.s32.totalorder %s80, %s81
      %p95 = scmp.eq.s32.totalorder %s21, 1
      %p96 = por %p94, %p95
      %p98 = scmp.ne.s32.totalorder %s81, %s97
      %p99 = scmp.eq.s32.totalorder %s21, 0
      %p100 = por %p98, %p99
      %s101 = ssub.s32 %s15, %s22
      %p102 = scmp.eq.s32.totalorder %s101, 0
      %s104 = sadd.s32 %s103, 1
      %s105 = scalar_select %p102, %s103, %s104
      %p108 = pneg %p102
      %p109 = scmp.eq.s32.totalorder %s15, 1
      %p110 = por %p108, %p109
      %p111 = scmp.ne.s32.totalorder %s103, %s106
      %p112 = scmp.eq.s32.totalorder %s15, 0
      %p113 = por %p111, %p112
      %p114 = scmp.ne.s32.totalorder %s103, %s106
      %p115 = scmp.eq.s32.totalorder %s20, 1
      %p116 = por %p114, %p115
      %p117 = scmp.ne.s32.totalorder %s106, %s107
      %p118 = scmp.eq.s32.totalorder %s20, 0
      %p119 = por %p117, %p118
      %p120 = scmp.ne.s32.totalorder %s106, %s107
      %p121 = scmp.eq.s32.totalorder %s21, 1
      %p122 = por %p120, %p121
      %p124 = scmp.ne.s32.totalorder %s107, %s123
      %p125 = scmp.eq.s32.totalorder %s21, 0
      %p126 = por %p124, %p125
      %s127 = ssub.s32 %s15, %s22
      %p128 = scmp.eq.s32.totalorder %s127, 0
      %s130 = sadd.s32 %s129, 1
      %s131 = scalar_select %p128, %s129, %s130
      %p134 = pneg %p128
      %p135 = scmp.eq.s32.totalorder %s15, 1
      %p136 = por %p134, %p135
      %p137 = scmp.ne.s32.totalorder %s129, %s132
      %p138 = scmp.eq.s32.totalorder %s15, 0
      %p139 = por %p137, %p138
      %p140 = scmp.ne.s32.totalorder %s129, %s132
      %p141 = scmp.eq.s32.totalorder %s20, 1
      %p142 = por %p140, %p141
      %p143 = scmp.ne.s32.totalorder %s132, %s133
      %p144 = scmp.eq.s32.totalorder %s20, 0
      %p145 = por %p143, %p144
      %p146 = scmp.ne.s32.totalorder %s132, %s133
      %p147 = scmp.eq.s32.totalorder %s21, 1
      %p148 = por %p146, %p147
      %p150 = scmp.ne.s32.totalorder %s133, %s149
      %p151 = scmp.eq.s32.totalorder %s21, 0
      %p152 = por %p150, %p151
      %s153 = ssub.s32 %s15, %s22
      %p154 = scmp.eq.s32.totalorder %s153, 0
      %s156 = sadd.s32 %s155, 1
      %s157 = scalar_select %p154, %s155, %s156
      %p160 = pneg %p154
      %p161 = scmp.eq.s32.totalorder %s15, 1
      %p162 = por %p160, %p161
      %p163 = scmp.ne.s32.totalorder %s155, %s158
      %p164 = scmp.eq.s32.totalorder %s15, 0
      %p165 = por %p163, %p164
      %p166 = scmp.ne.s32.totalorder %s155, %s158
      %p167 = scmp.eq.s32.totalorder %s20, 1
      %p168 = por %p166, %p167
      %p169 = scmp.ne.s32.totalorder %s158, %s159
      %p170 = scmp.eq.s32.totalorder %s20, 0
      %p171 = por %p169, %p170
      %p172 = scmp.ne.s32.totalorder %s158, %s159
      %p173 = scmp.eq.s32.totalorder %s21, 1
      %p174 = por %p172, %p173
      %p176 = scmp.ne.s32.totalorder %s159, %s175
      %p177 = scmp.eq.s32.totalorder %s21, 0
      %p178 = por %p176, %p177
      %p179 = scmp.le.s32.totalorder 1, %s15
      %p180 = scmp.lt.s32.totalorder %s15, 3
      %p181 = pnand %p179, %p180
      %p182 = pneg %p181
      // Predicated region
      $region9: #{tpu_custom_call.1} parent=5 // pred_check
        _
      $region10: #{tpu_custom_call.1} parent=5 // pred_check_branch
        %184 = sbr.rel (%p181) target = $region12
      $region11: #{tpu_custom_call.1} parent=5 // pred_region
        %s185 = ssub.s32 %s15, 1
      $region12: #{tpu_custom_call.1} parent=5 // pred_fallthru
        _
      %p186 = scmp.lt.s32.totalorder %s15, 2
      // Predicated region
      $region13: #{tpu_custom_call.1} parent=5 // pred_check
        %p187 = pneg %p186
      $region14: #{tpu_custom_call.1} parent=5 // pred_check_branch
        %189 = sbr.rel (%p187) target = $region16
      $region15: #{tpu_custom_call.1} parent=5 // pred_region
        // Predicated region
        $region17: #{tpu_custom_call.1} parent=15 // pred_check
          %p190 = pneg %p35
        $region18: #{tpu_custom_call.1} parent=15 // pred_check_branch
          %192 = sbr.rel (%p190) target = $region20
        $region19: #{tpu_custom_call.1} parent=15 // pred_region
          %p193 = scmp.lt.s32.totalorder %s15, 1
          %s194 = scalar_select %p193, %s15, 1
          %s195 = smul.addr %s194, 4
          %s196 = scalar_lea.vmem %s0, %s195
        $region20: #{tpu_custom_call.1} parent=15 // pred_fallthru
          _
        // Predicated region
        $region21: #{tpu_custom_call.1} parent=15 // pred_check
          %p197 = pneg %p61
        $region22: #{tpu_custom_call.1} parent=15 // pred_check_branch
          %199 = sbr.rel (%p197) target = $region24
        $region23: #{tpu_custom_call.1} parent=15 // pred_region
          %p200 = scmp.lt.s32.totalorder %s15, 1
          %s201 = scalar_select %p200, %s15, 1
          %s202 = smul.addr %s201, 4
          %s203 = scalar_lea.vmem %s1, %s202
        $region24: #{tpu_custom_call.1} parent=15 // pred_fallthru
          _
        // Predicated region
        $region25: #{tpu_custom_call.1} parent=15 // pred_check
          %p204 = pneg %p87
        $region26: #{tpu_custom_call.1} parent=15 // pred_check_branch
          %206 = sbr.rel (%p204) target = $region28
        $region27: #{tpu_custom_call.1} parent=15 // pred_region
          %p207 = scmp.lt.s32.totalorder %s15, 1
          %s208 = scalar_select %p207, %s15, 1
          %s209 = smul.addr %s208, 14
          %s210 = smul.addr %s209, 8
          %s211 = scalar_lea.vmem %s2, %s210
        $region28: #{tpu_custom_call.1} parent=15 // pred_fallthru
          _
        // Predicated region
        $region29: #{tpu_custom_call.1} parent=15 // pred_check
          %p212 = pneg %p113
        $region30: #{tpu_custom_call.1} parent=15 // pred_check_branch
          %214 = sbr.rel (%p212) target = $region32
        $region31: #{tpu_custom_call.1} parent=15 // pred_region
          %p215 = scmp.lt.s32.totalorder %s15, 1
          %s216 = scalar_select %p215, %s15, 1
          %s217 = smul.addr %s216, 18
          %s218 = smul.addr %s217, 8
          %s219 = scalar_lea.vmem %s3, %s218
        $region32: #{tpu_custom_call.1} parent=15 // pred_fallthru
          _
      $region16: #{tpu_custom_call.1} parent=5 // pred_fallthru
        _
      %p220 = scmp.le.s32.totalorder 1, %s15
      %p221 = scmp.lt.s32.totalorder %s15, 3
      %p222 = pnand %p220, %p221
      %p223 = pneg %p222
      // Predicated region
      $region33: #{tpu_custom_call.1} parent=5 // pred_check
        _
      $region34: #{tpu_custom_call.1} parent=5 // pred_check_branch
        %225 = sbr.rel (%p222) target = $region36
      $region35: #{tpu_custom_call.1} parent=5 // pred_region
        %s226 = ssub.s32 %s15, 1
        %p227 = scmp.lt.s32.totalorder %s20, 1
        %s228 = scalar_select %p227, %s20, 1
        %s229 = smul.addr %s228, 4
        %s230 = scalar_lea.vmem %s0, %s229
        %p231 = pneg %p41
        %p232 = pneg %p38
        %p233 = scmp.lt.s32.totalorder %s20, 1
        %s234 = scalar_select %p233, %s20, 1
        %s235 = smul.addr %s234, 4
        %s236 = scalar_lea.vmem %s1, %s235
        %p237 = pneg %p67
        %p238 = pneg %p64
        %p239 = scmp.lt.s32.totalorder %s20, 1
        %s240 = scalar_select %p239, %s20, 1
        %s241 = smul.addr %s240, 14
        %s242 = smul.addr %s241, 8
        %s243 = scalar_lea.vmem %s2, %s242
        %p244 = pneg %p93
        %p245 = pneg %p90
        %p246 = scmp.lt.s32.totalorder %s20, 1
        %s247 = scalar_select %p246, %s20, 1
        %s248 = smul.addr %s247, 18
        %s249 = smul.addr %s248, 8
        %s250 = scalar_lea.vmem %s3, %s249
        %p251 = pneg %p119
        %p252 = pneg %p116
        %p253 = pneg %p145
        %p254 = pneg %p142
        %p255 = scmp.lt.s32.totalorder %s20, 1
        %s256 = scalar_select %p255, %s20, 1
        %s257 = smul.addr %s256, 2
        %s258 = smul.addr %s257, 4
        %s259 = scalar_lea.vmem %s4, %s258
        %p260 = pneg %p171
        %p261 = pneg %p168
        %s262 = sand.u32 %s158, 1
        %s263 = scalar_lea.sflag [#allocation3], %s262
        %s264 = sand.u32 %s158, 1
        %s265 = smul.addr %s264, 4
        %s266 = scalar_lea.vmem [#allocation2], %s265
        %p267 = scmp.lt.s32.totalorder %s20, 1
        %s268 = scalar_select %p267, %s20, 1
        %s269 = smul.addr %s268, 4
        %s270 = scalar_lea.vmem %s0, %s269
        %p271 = scmp.lt.s32.totalorder %s20, 1
        %s272 = scalar_select %p271, %s20, 1
        %s273 = smul.addr %s272, 4
        %s274 = scalar_lea.vmem %s1, %s273
        %p275 = scmp.lt.s32.totalorder %s20, 1
        %s276 = scalar_select %p275, %s20, 1
        %s277 = smul.addr %s276, 14
        %s278 = smul.addr %s277, 8
        %s279 = scalar_lea.vmem %s2, %s278
        %p280 = scmp.lt.s32.totalorder %s20, 1
        %s281 = scalar_select %p280, %s20, 1
        %s282 = smul.addr %s281, 18
        %s283 = smul.addr %s282, 8
        %s284 = scalar_lea.vmem %s3, %s283
        %p285 = scmp.lt.s32.totalorder %s20, 1
        %s286 = scalar_select %p285, %s20, 1
        %s287 = smul.addr %s286, 2
        %s288 = smul.addr %s287, 4
        %s289 = scalar_lea.vmem %s4, %s288
        %v290 = vld [vmem:[%s270] sm:$0x7]
        %v291 = vld [vmem:[%s284] sm:$0xff]
        %v292 = vld [vmem:[%s284 + $0x8] sm:$0xff]
        %v293 = vld [vmem:[%s284 + $0x10] sm:$0xff]
        %v294 = vld [vmem:[%s284 + $0x18] sm:$0xff]
        %v295 = vld [vmem:[%s284 + $0x20] sm:$0xff]
        %v296 = vld [vmem:[%s284 + $0x28] sm:$0xff]
        %v297 = vld [vmem:[%s284 + $0x30] sm:$0xff]
        %v298 = vld [vmem:[%s284 + $0x38] sm:$0xff]
        %v299 = vld [vmem:[%s284 + $0x40] sm:$0xff]
        %v300 = vld [vmem:[%s284 + $0x48] sm:$0xff]
        %v301 = vld [vmem:[%s284 + $0x50] sm:$0xff]
        %v302 = vld [vmem:[%s284 + $0x58] sm:$0xff]
        %v303 = vld [vmem:[%s284 + $0x60] sm:$0xff]
        %v304 = vld [vmem:[%s284 + $0x68] sm:$0xff]
        %v305 = vld [vmem:[%s284 + $0x70] sm:$0xff]
        %v306 = vld [vmem:[%s284 + $0x78] sm:$0xff]
        %v307 = vld [vmem:[%s284 + $0x80] sm:$0xff]
        %v308 = vld [vmem:[%s284 + $0x88] sm:$0xff]
        %309 = vmatprep.subr.mxu0 0.0
        %310 = vmatpush1.xpose.msra.mxu0 %v291
        %311 = vmatprep.subr.mxu0 0.0
        %312 = vmatpush1.xpose.msra.mxu0 %v292
        %313 = vmatprep.subr.mxu0 0.0
        %314 = vmatpush1.xpose.msra.mxu0 %v293
        %315 = vmatprep.subr.mxu0 0.0
        %316 = vmatpush1.xpose.msra.mxu0 %v294
        %317 = vmatprep.subr.mxu0 0.0
        %318 = vmatpush1.xpose.msra.mxu0 %v295
        %319 = vmatprep.subr.mxu0 0.0
        %320 = vmatpush1.xpose.msra.mxu0 %v296
        %321 = vmatprep.subr.mxu0 0.0
        %322 = vmatpush1.xpose.msra.mxu0 %v297
        %323 = vmatprep.subr.mxu0 0.0
        %324 = vmatpush1.xpose.msra.mxu0 %v298
        %325 = vmatprep.subr.mxu0 0.0
        %326 = vmatpush1.xpose.msra.mxu0 %v299
        %327 = vmatprep.subr.mxu0 0.0
        %328 = vmatpush1.xpose.msra.mxu0 %v300
        %329 = vmatprep.subr.mxu0 0.0
        %330 = vmatpush1.xpose.msra.mxu0 %v301
        %331 = vmatprep.subr.mxu0 0.0
        %332 = vmatpush1.xpose.msra.mxu0 %v302
        %333 = vmatprep.subr.mxu0 0.0
        %334 = vmatpush1.xpose.msra.mxu0 %v303
        %335 = vmatprep.subr.mxu0 0.0
        %336 = vmatpush1.xpose.msra.mxu0 %v304
        %337 = vmatprep.subr.mxu0 0.0
        %338 = vmatpush1.xpose.msra.mxu0 %v305
        %339 = vmatprep.subr.mxu0 0.0
        %340 = vmatpush1.xpose.msra.mxu0 %v306
        %341 = vmatprep.subr.mxu0 0.0
        %342 = vmatpush1.xpose.msra.mxu0 %v307
        %343 = vmatprep.subr.mxu0 0.0
        %344 = vmatpush1.xpose.msra.mxu0 %v308
        %345 = vmatprep.subr.mxu0 0.0
        %346 = vmatpush1.xpose.msra.mxu0 0.0
        %347 = vmatprep.subr.mxu0 0.0
        %348 = vmatpush1.xpose.msra.mxu0 0.0
        %349 = vmatprep.subr.mxu0 0.0
        %350 = vmatpush1.xpose.msra.mxu0 0.0
        %351 = vmatprep.subr.mxu0 0.0
        %352 = vmatpush1.xpose.msra.mxu0 0.0
        %353 = vmatprep.subr.mxu0 0.0
        %354 = vmatpush1.xpose.msra.mxu0 0.0
        %355 = vmatprep.subr.mxu0 0.0
        %356 = vmatpush1.xpose.msra.mxu0 0.0
        %357 = vmatprep.subr.mxu0 0.0
        %358 = vmatpush1.xpose.msra.mxu0 0.0
        %359 = vmatprep.subr.mxu0 0.0
        %360 = vmatpush1.xpose.msra.mxu0 0.0
        %361 = vmatprep.subr.mxu0 0.0
        %362 = vmatpush1.xpose.msra.mxu0 0.0
        %363 = vmatprep.subr.mxu0 0.0
        %364 = vmatpush1.xpose.msra.mxu0 0.0
        %365 = vmatprep.subr.mxu0 0.0
        %366 = vmatpush1.xpose.msra.mxu0 0.0
        %367 = vmatprep.subr.mxu0 0.0
        %368 = vmatpush1.xpose.msra.mxu0 0.0
        %369 = vmatprep.subr.mxu0 0.0
        %370 = vmatpush1.xpose.msra.mxu0 0.0
        %371 = vmatprep.subr.mxu0 0.0
        %372 = vmatpush1.xpose.msra.mxu0 0.0
        %373 = vmatprep.mubr.f32.mxu0 0.0
        %374 = vmatmul.mubr.f32.gmra.mrb[0].mxu0 %v290
        %v375 = vpop.f32.mrb[0].mxu0
        %v376 = vadd.f32 0.0, %v375
        %v377 = vpop.f32.mrb[0].mxu0
        %v378 = vadd.f32 0.0, %v377
        %379 = vdwg.mxu0
        %v382 = vcombine.low %v376, %v378
        %vm384 = vcmask 1042432
        %vm385 = vcmask 129028
        %vm386 = vmor %vm385, %vm384
        %387 = vst.msk [vmem:[%s289] sm:$0x77] %vm386, %v382
        %v388 = vld [vmem:[%s274] sm:$0xf]
        %v389 = vld [vmem:[%s279] sm:$0xff]
        %v390 = vld [vmem:[%s279 + $0x8] sm:$0xff]
        %v391 = vld [vmem:[%s279 + $0x10] sm:$0xff]
        %v392 = vld [vmem:[%s279 + $0x18] sm:$0xff]
        %v393 = vld [vmem:[%s279 + $0x20] sm:$0xff]
        %v394 = vld [vmem:[%s279 + $0x28] sm:$0xff]
        %v395 = vld [vmem:[%s279 + $0x30] sm:$0xff]
        %v396 = vld [vmem:[%s279 + $0x38] sm:$0xff]
        %v397 = vld [vmem:[%s279 + $0x40] sm:$0xff]
        %v398 = vld [vmem:[%s279 + $0x48] sm:$0xff]
        %v399 = vld [vmem:[%s279 + $0x50] sm:$0xff]
        %v400 = vld [vmem:[%s279 + $0x58] sm:$0xff]
        %v401 = vld [vmem:[%s279 + $0x60] sm:$0xff]
        %v402 = vld [vmem:[%s279 + $0x68] sm:$0xf]
        %403 = vmatprep.subr.mxu0 0.0
        %404 = vmatpush1.xpose.msra.mxu0 %v389
        %405 = vmatprep.subr.mxu0 0.0
        %406 = vmatpush1.xpose.msra.mxu0 %v390
        %407 = vmatprep.subr.mxu0 0.0
        %408 = vmatpush1.xpose.msra.mxu0 %v391
        %409 = vmatprep.subr.mxu0 0.0
        %410 = vmatpush1.xpose.msra.mxu0 %v392
        %411 = vmatprep.subr.mxu0 0.0
        %412 = vmatpush1.xpose.msra.mxu0 %v393
        %413 = vmatprep.subr.mxu0 0.0
        %414 = vmatpush1.xpose.msra.mxu0 %v394
        %415 = vmatprep.subr.mxu0 0.0
        %416 = vmatpush1.xpose.msra.mxu0 %v395
        %417 = vmatprep.subr.mxu0 0.0
        %418 = vmatpush1.xpose.msra.mxu0 %v396
        %419 = vmatprep.subr.mxu0 0.0
        %420 = vmatpush1.xpose.msra.mxu0 %v397
        %421 = vmatprep.subr.mxu0 0.0
        %422 = vmatpush1.xpose.msra.mxu0 %v398
        %423 = vmatprep.subr.mxu0 0.0
        %424 = vmatpush1.xpose.msra.mxu0 %v399
        %425 = vmatprep.subr.mxu0 0.0
        %426 = vmatpush1.xpose.msra.mxu0 %v400
        %427 = vmatprep.subr.mxu0 0.0
        %428 = vmatpush1.xpose.msra.mxu0 %v401
        %429 = vmatprep.subr.mxu0 0.0
        %430 = vmatpush1.xpose.msra.mxu0 %v402
        %431 = vmatprep.subr.mxu0 0.0
        %432 = vmatpush1.xpose.msra.mxu0 0.0
        %433 = vmatprep.subr.mxu0 0.0
        %434 = vmatpush1.xpose.msra.mxu0 0.0
        %435 = vmatprep.subr.mxu0 0.0
        %436 = vmatpush1.xpose.msra.mxu0 0.0
        %437 = vmatprep.subr.mxu0 0.0
        %438 = vmatpush1.xpose.msra.mxu0 0.0
        %439 = vmatprep.subr.mxu0 0.0
        %440 = vmatpush1.xpose.msra.mxu0 0.0
        %441 = vmatprep.subr.mxu0 0.0
        %442 = vmatpush1.xpose.msra.mxu0 0.0
        %443 = vmatprep.subr.mxu0 0.0
        %444 = vmatpush1.xpose.msra.mxu0 0.0
        %445 = vmatprep.subr.mxu0 0.0
        %446 = vmatpush1.xpose.msra.mxu0 0.0
        %447 = vmatprep.subr.mxu0 0.0
        %448 = vmatpush1.xpose.msra.mxu0 0.0
        %449 = vmatprep.subr.mxu0 0.0
        %450 = vmatpush1.xpose.msra.mxu0 0.0
        %451 = vmatprep.subr.mxu0 0.0
        %452 = vmatpush1.xpose.msra.mxu0 0.0
        %453 = vmatprep.subr.mxu0 0.0
        %454 = vmatpush1.xpose.msra.mxu0 0.0
        %455 = vmatprep.subr.mxu0 0.0
        %456 = vmatpush1.xpose.msra.mxu0 0.0
        %457 = vmatprep.subr.mxu0 0.0
        %458 = vmatpush1.xpose.msra.mxu0 0.0
        %459 = vmatprep.subr.mxu0 0.0
        %460 = vmatpush1.xpose.msra.mxu0 0.0
        %461 = vmatprep.subr.mxu0 0.0
        %462 = vmatpush1.xpose.msra.mxu0 0.0
        %463 = vmatprep.subr.mxu0 0.0
        %464 = vmatpush1.xpose.msra.mxu0 0.0
        %465 = vmatprep.subr.mxu0 0.0
        %466 = vmatpush1.xpose.msra.mxu0 0.0
        %467 = vmatprep.mubr.f32.mxu0 0.0
        %468 = vmatmul.mubr.f32.gmra.mrb[0].mxu0 %v388
        %v469 = vpop.f32.mrb[0].mxu0
        %v470 = vadd.f32 0.0, %v469
        %v471 = vpop.f32.mrb[0].mxu0
        %472 = vdwg.mxu0
        %vm473 = vcmask 879616
        %474 = vst.msk [vmem:[%s266] sm:$0xf] %vm473, %v470
        %p475 = scmp.lt.s32.totalorder %s20, 1
        %s476 = scalar_select %p475, %s20, 1
        %s477 = smul.addr %s476, 2
        %s478 = smul.addr %s477, 4
        %s479 = scalar_lea.vmem %s4, %s478
        %s480 = sand.u32 %s158, 1
        %s481 = scalar_lea.sflag [#allocation3], %s480
        %s482 = sand.u32 %s158, 1
        %s483 = smul.addr %s482, 4
        %s484 = scalar_lea.vmem [#allocation2], %s483
        // Predicated region
        $region37: #{tpu_custom_call.1} parent=35 // pred_check
          %p485 = pneg %p142
        $region38: #{tpu_custom_call.1} parent=35 // pred_check_branch
          %487 = sbr.rel (%p485) target = $region40
        $region39: #{tpu_custom_call.1} parent=35 // pred_region
          _
        $region40: #{tpu_custom_call.1} parent=35 // pred_fallthru
          _
        // Predicated region
        $region41: #{tpu_custom_call.1} parent=35 // pred_check
          %p488 = pneg %p168
        $region42: #{tpu_custom_call.1} parent=35 // pred_check_branch
          %490 = sbr.rel (%p488) target = $region44
        $region43: #{tpu_custom_call.1} parent=35 // pred_region
          %s492 = ssub.s32 64, 64
          %493 = vsyncadd %s481, %s492
          %s494 = smul.addr %s20, 64
          %s495 = scalar_lea.hbm %s5, %s494
          %s497 = sshll.u32 %s484, 4
          %s498 = int_to_ptr.vmem [resolvable:$true] %s497
          %500 = dma.vmem_to_hbm [thread:$0]  %s498, 64, %s495, %s481
        $region44: #{tpu_custom_call.1} parent=35 // pred_fallthru
          _
      $region36: #{tpu_custom_call.1} parent=5 // pred_fallthru
        _
      %p501 = scmp.le.s32.totalorder 2, %s15
      // Predicated region
      $region45: #{tpu_custom_call.1} parent=5 // pred_check
        %p502 = pneg %p501
      $region46: #{tpu_custom_call.1} parent=5 // pred_check_branch
        %504 = sbr.rel (%p502) target = $region48
      $region47: #{tpu_custom_call.1} parent=5 // pred_region
        %s505 = ssub.s32 %s15, 2
        // Predicated region
        $region49: #{tpu_custom_call.1} parent=47 // pred_check
          %p506 = pneg %p148
        $region50: #{tpu_custom_call.1} parent=47 // pred_check_branch
          %508 = sbr.rel (%p506) target = $region52
        $region51: #{tpu_custom_call.1} parent=47 // pred_region
          %p509 = scmp.lt.s32.totalorder %s21, 1
          %s510 = scalar_select %p509, %s21, 1
          %s511 = smul.addr %s510, 2
          %s512 = smul.addr %s511, 4
          %s513 = scalar_lea.vmem %s4, %s512
        $region52: #{tpu_custom_call.1} parent=47 // pred_fallthru
          _
        // Predicated region
        $region53: #{tpu_custom_call.1} parent=47 // pred_check
          %p514 = pneg %p174
        $region54: #{tpu_custom_call.1} parent=47 // pred_check_branch
          %516 = sbr.rel (%p514) target = $region56
        $region55: #{tpu_custom_call.1} parent=47 // pred_region
          %s517 = sand.u32 %s159, 1
          %s518 = scalar_lea.sflag [#allocation3], %s517
          %s519 = sand.u32 %s159, 1
          %s520 = smul.addr %s519, 4
          %s521 = scalar_lea.vmem [#allocation2], %s520
          %522 = dma.done %s518, 64
        $region56: #{tpu_custom_call.1} parent=47 // pred_fallthru
          _
      $region48: #{tpu_custom_call.1} parent=5 // pred_fallthru
        _
    $region6: #{tpu_custom_call.1} parent=1 // loop_footer
      %s19 = sadd.s32 1, %s15
    $region7: #{tpu_custom_call.1} parent=1 // loop_footer_branch
      %14 = sbr.rel target = $region3
    $region8: #{tpu_custom_call.1} parent=1 // loop_exit
      _
    %523 = vsyncpa [#allocation3], 1
    %s524 = scalar_lea.sflag [#allocation3], 1
    %525 = vsyncpa %s524, 1

</llo_original>
